<compile_context>
chip_gen: v7x
topology: tpu7x:2x2x1
jax: 0.10.0
libtpu: 0.0.40
codegen_flags: <defaults>
</compile_context>

<pallas_src>
import functools

import jax
import jax.numpy as jnp
from jax import lax
from jax.experimental import pallas as pl
from jax.experimental.pallas import tpu as pltpu


# ----------------------------- kernels --------------------------------------


def _mean_pool_even_kernel(x_ref, o_ref, *, factor, feat):
    """remainder == 0 fast path.  x_ref: (tile_r, factor*feat), o_ref: (tile_r, feat).

    Window frames are adjacent lane chunks; divisor is a constant, so the body
    is (factor-1) adds + one constant multiply per element — pure VPU work on
    the DMA roofline.  Per-chunk cast keeps vreg pressure low for bf16.
    """
    acc = x_ref[:, 0:feat].astype(jnp.float32)
    for k in range(1, factor):                       # static, tiny unroll
        acc = acc + x_ref[:, k * feat:(k + 1) * feat].astype(jnp.float32)
    o_ref[...] = (acc * (1.0 / factor)).astype(o_ref.dtype)


def _mean_pool_rows_kernel(x_ref, o_ref, *, factor, t_in, n_t, tile_t):
    """Ragged path on the raw layout.  x_ref: (factor*tile_t, feat),
    o_ref: (tile_t, feat).  Grid = (B, n_t); time tile index = program_id(1).

    Interior tiles: unmasked accumulate + constant 1/factor.
    Last tile only: (tile_t,1) validity mask + per-row ceil_mode divisor.
    """
    tt = pl.program_id(1)

    @pl.when(tt < n_t - 1)
    def _interior():
        acc = x_ref[pl.ds(0, tile_t, factor), :].astype(jnp.float32)
        for k in range(1, factor):
            acc = acc + x_ref[pl.ds(k, tile_t, factor), :].astype(jnp.float32)
        o_ref[...] = (acc * (1.0 / factor)).astype(o_ref.dtype)

    @pl.when(tt == n_t - 1)
    def _tail():
        rows = tt * tile_t + lax.broadcasted_iota(jnp.int32, (tile_t, 1), 0)
        acc = jnp.zeros(o_ref.shape, jnp.float32)
        for k in range(factor):
            xk = x_ref[pl.ds(k, tile_t, factor), :].astype(jnp.float32)
            valid = (rows * factor + k) < t_in       # (tile_t, 1), broadcasts
            acc = acc + jnp.where(valid, xk, 0.0)
        # ceil_mode AvgPool1d divisor: #valid frames in the window (clipped to
        # >=1 for boundary-padded garbage rows, which are dropped on writeback).
        counts = jnp.clip(t_in - rows * factor, 1, factor).astype(jnp.float32)
        # Exact (tile_t,1) reciprocal: negligible cost (last tile only), keeps
        # full f32 precision for the tail mean.
        o_ref[...] = (acc * (1.0 / counts)).astype(o_ref.dtype)


def _mean_pool_tail_lanes_kernel(x_ref, o_ref, *, factor, feat, t_in):
    """Tiny ragged inputs (t_out < 8): whole zero-padded time axis per block.

    x_ref: (t_out, factor*feat), o_ref: (t_out, feat).  Padded frames are zero
    so the per-row divisor (true frame count) yields the correct tail mean.
    """
    acc = x_ref[:, 0:feat].astype(jnp.float32)
    for k in range(1, factor):
        acc = acc + x_ref[:, k * feat:(k + 1) * feat].astype(jnp.float32)
    rows = lax.broadcasted_iota(jnp.int32, (o_ref.shape[0], 1), 0)
    counts = jnp.clip(t_in - rows * factor, 1, factor).astype(jnp.float32)
    o_ref[...] = (acc * (1.0 / counts)).astype(o_ref.dtype)


# ----------------------------- wrapper ---------------------------------------


def _round_up(x, m):
    return ((x + m - 1) // m) * m


def _vmem_capacity_bytes():
    """Physical VMEM per TensorCore; conservative fallback if unqueryable."""
    try:
        return int(pltpu.get_tpu_info().vmem_capacity_bytes)
    except Exception:  # pragma: no cover - defensive on older runtimes
        return 64 << 20                               # v7x per-TC value


def _target_block_bytes(vmem_cap):
    """Input-block byte target: ~4 MiB on v7x (64 MiB VMEM), ~8 MiB otherwise."""
    return (4 << 20) if vmem_cap <= (64 << 20) else (8 << 20)


def _mosaic_params(in_block_bytes, out_block_bytes, vmem_cap, semantics):
    """Explicit scoped-VMEM limit from the ACTUAL block sizes.

    2*(in+out) covers the default double-buffering; +4 MiB headroom for
    compiler scratch; floor of 32 MiB so small-block configs never regress
    below sensible defaults; capped at physical VMEM (v7x: 64 MiB)."""
    ws = 2 * (in_block_bytes + out_block_bytes)
    limit = int(min(max(ws + (4 << 20), 32 << 20), vmem_cap))
    return pltpu.CompilerParams(dimension_semantics=semantics,
                                vmem_limit_bytes=limit)


def _ensure_min_steps(n_rows, tile, other_steps, min_steps=2):
    """Shrink `tile` (multiple of 8) so other_steps*ceil(n_rows/tile) >= min_steps
    when possible — guarantees both v7x TensorCores get work even for B == 1."""
    while other_steps * (-(-n_rows // tile)) < min_steps and tile > 8:
        tile = max(8, _round_up(tile // 2, 8))
    return tile


def _pick_tile_rows(n_rows, in_row_bytes, block_bytes, override):
    """Output rows per grid step: multiple of 8, input block ~= block_bytes."""
    if override is not None:
        tile = max(8, (int(override) // 8) * 8)
    else:
        tile = max(8, (block_bytes // max(1, in_row_bytes)) // 8 * 8)
    return min(tile, _round_up(n_rows, 8))


def _pool_batch_first(x_bt, factor, tile_t=None):
    """x_bt: [B, T, F] -> mean-pooled [B, ceil(T/factor), F] (ceil_mode)."""
    B, T, F = x_bt.shape
    t_out = -(-T // factor)
    dtype = x_bt.dtype
    itemsize = jnp.dtype(dtype).itemsize
    remainder = T % factor
    vmem_cap = _vmem_capacity_bytes()
    block_bytes = _target_block_bytes(vmem_cap)
    in_row_bytes = factor * F * itemsize              # input bytes per out row

    if remainder == 0:
        # ---- lane fast path: batch folded into a single tiled row axis -----
        rows = B * t_out
        tile_r = _pick_tile_rows(rows, in_row_bytes, block_bytes, tile_t)
        tile_r = _ensure_min_steps(rows, tile_r, other_steps=1)
        n_r = -(-rows // tile_r)
        kernel = functools.partial(_mean_pool_even_kernel, factor=factor, feat=F)
        out_flat = pl.pallas_call(
            kernel,
            out_shape=jax.ShapeDtypeStruct((rows, F), dtype),
            grid=(n_r,),
            in_specs=[pl.BlockSpec((tile_r, factor * F), lambda i: (i, 0))],
            out_specs=pl.BlockSpec((tile_r, F), lambda i: (i, 0)),
            compiler_params=_mosaic_params(
                tile_r * factor * F * itemsize, tile_r * F * itemsize,
                vmem_cap, ("parallel",)),
        )(x_bt.reshape(rows, factor * F))             # FREE reshape
        return out_flat.reshape(B, t_out, F)          # FREE reshape

    if t_out < 8:
        # ---- tiny ragged input: pad a few zero rows, one block per batch ---
        x_pad = jnp.pad(x_bt, ((0, 0), (0, t_out * factor - T), (0, 0)))
        x_in = x_pad.reshape(B, t_out, factor * F)
        kernel = functools.partial(_mean_pool_tail_lanes_kernel,
                                   factor=factor, feat=F, t_in=T)
        return pl.pallas_call(
            kernel,
            out_shape=jax.ShapeDtypeStruct((B, t_out, F), dtype),
            grid=(B,),
            in_specs=[pl.BlockSpec((None, t_out, factor * F),
                                   lambda b: (b, 0, 0))],
            out_specs=pl.BlockSpec((None, t_out, F), lambda b: (b, 0, 0)),
            compiler_params=_mosaic_params(
                t_out * factor * F * itemsize, t_out * F * itemsize,
                vmem_cap, ("parallel",)),
        )(x_in)

    # ---- ragged tail with enough rows: raw layout, mask only the last tile -
    tile = _pick_tile_rows(t_out, in_row_bytes, block_bytes, tile_t)
    tile = _ensure_min_steps(t_out, tile, other_steps=B)
    n_t = -(-t_out // tile)
    kernel = functools.partial(_mean_pool_rows_kernel, factor=factor,
                               t_in=T, n_t=n_t, tile_t=tile)
    return pl.pallas_call(
        kernel,
        out_shape=jax.ShapeDtypeStruct((B, t_out, F), dtype),
        grid=(B, n_t),
        in_specs=[pl.BlockSpec((None, factor * tile, F),
                               lambda b, t: (b, t, 0))],
        out_specs=pl.BlockSpec((None, tile, F), lambda b, t: (b, t, 0)),
        compiler_params=_mosaic_params(
            tile * factor * F * itemsize, tile * F * itemsize,
            vmem_cap, ("parallel", "parallel")),
    )(x_bt)


def mean_pool_subsampler(xs, xlens, subsampling_factor=2, batch_first=True,
                         tile_t=None):
    """JAX/Pallas port of MeanPoolSubsampler.forward.

    xs:    [B, T, F] if batch_first else [T, B, F]
    xlens: int32 [B]
    Returns (xs_pooled, xlens_pooled) with the same axis convention.
    """
    factor = int(subsampling_factor)
    if factor == 1:
        return xs, xlens

    if batch_first:
        out = _pool_batch_first(xs, factor, tile_t)
    else:
        T, B, F = xs.shape
        # Time-major: fold (B, F) into the lane axis with FREE reshapes — no
        # transposes around the kernel and lane-dense (B*F-wide) stores.
        pooled = _pool_batch_first(xs.reshape(1, T, B * F), factor, tile_t)
        out = pooled.reshape(pooled.shape[1], B, F)

    # Length update for AvgPool1d(kernel=stride=factor, ceil_mode=True):
    # new_len = ceil(len / factor).  Tiny per-batch scalar op, kept in JAX.
    xlens_out = jnp.maximum(
        1, (xlens.astype(jnp.int32) + factor - 1) // factor).astype(jnp.int32)
    return out, xlens_out


# ----------------------------- reference & test -------------------------------


def _reference(xs, xlens, factor, batch_first=True):
    """Plain-JAX mirror of AvgPool1d(kernel=stride=factor, ceil_mode=True)."""
    if factor == 1:
        return xs, xlens
    x = xs if batch_first else jnp.transpose(xs, (1, 0, 2))
    B, T, F = x.shape
    t_out = -(-T // factor)
    pad = t_out * factor - T
    xp = jnp.pad(x, ((0, 0), (0, pad), (0, 0)))
    summed = xp.reshape(B, t_out, factor, F).astype(jnp.float32).sum(axis=2)
    counts = jnp.minimum(factor, T - jnp.arange(t_out) * factor).astype(jnp.float32)
    out = (summed / counts[None, :, None]).astype(xs.dtype)
    if not batch_first:
        out = jnp.transpose(out, (1, 0, 2))
    xl = jnp.maximum(1, (xlens.astype(jnp.int32) + factor - 1) // factor
                     ).astype(jnp.int32)
    return out, xl


if __name__ == "__main__":
    key = jax.random.PRNGKey(0)
    k1, k2, k3, k4 = jax.random.split(key, 4)

    # Case 1: batch-first, even T -> fused-row lane fast path, tiled grid.
    B, T, F = 2, 48, 128
    xs = jax.random.normal(k1, (B, T, F), dtype=jnp.float32)
    xlens = jnp.array([48, 37], dtype=jnp.int32)
    out, olens = mean_pool_subsampler(xs, xlens, 2, batch_first=True, tile_t=8)
    out = jax.block_until_ready(out)
    ref, rlens = _reference(xs, xlens, 2, batch_first=True)
    assert out.shape == ref.shape, (out.shape, ref.shape)
    assert jnp.allclose(out, ref, atol=1e-5), "case1 output mismatch"
    assert jnp.array_equal(olens, rlens), "case1 xlens mismatch"

    # Case 2: batch-first, odd T -> rows path, masking only on the last tile.
    T2 = 51
    xs2 = jax.random.normal(k2, (B, T2, F), dtype=jnp.float32)
    xlens2 = jnp.array([51, 20], dtype=jnp.int32)
    out2, olens2 = mean_pool_subsampler(xs2, xlens2, 2, batch_first=True, tile_t=8)
    out2 = jax.block_until_ready(out2)
    ref2, rlens2 = _reference(xs2, xlens2, 2, batch_first=True)
    assert out2.shape == ref2.shape
    assert jnp.allclose(out2, ref2, atol=1e-5), "case2 output mismatch"
    assert jnp.array_equal(olens2, rlens2), "case2 xlens mismatch"

    # Case 3: time-major (batch_first=False), factor=4 with remainder, tiny
    # t_out -> padded single-block-per-batch path; free reshapes only.
    T3 = 22
    xs3 = jax.random.normal(k3, (T3, B, F), dtype=jnp.float32)
    xlens3 = jnp.array([22, 9], dtype=jnp.int32)
    out3, olens3 = mean_pool_subsampler(xs3, xlens3, 4, batch_first=False)
    out3 = jax.block_until_ready(out3)
    ref3, rlens3 = _reference(xs3, xlens3, 4, batch_first=False)
    assert out3.shape == ref3.shape
    assert jnp.allclose(out3, ref3, atol=1e-5), "case3 output mismatch"
    assert jnp.array_equal(olens3, rlens3), "case3 xlens mismatch"

    # Case 4: bf16 passthrough, auto tile selection (byte-sized blocks,
    # >=2 grid steps for the two v7x TensorCores).
    xs_bf = xs.astype(jnp.bfloat16)
    out4, _ = mean_pool_subsampler(xs_bf, xlens, 2, batch_first=True)
    out4 = jax.block_until_ready(out4)
    ref4, _ = _reference(xs_bf, xlens, 2, batch_first=True)
    assert out4.dtype == jnp.bfloat16
    assert jnp.allclose(out4.astype(jnp.float32), ref4.astype(jnp.float32),
                        atol=1e-2), "case4 bf16 mismatch"

    # Case 5: B=1, factor=3, even T, auto tiles -> fused-row path with the
    # grid split so both cores get work; constant 1/3 divisor.
    T5 = 300
    xs5 = jax.random.normal(k4, (1, T5, F), dtype=jnp.float32)
    xlens5 = jnp.array([300], dtype=jnp.int32)
    out5, olens5 = mean_pool_subsampler(xs5, xlens5, 3, batch_first=True)
    out5 = jax.block_until_ready(out5)
    ref5, rlens5 = _reference(xs5, xlens5, 3, batch_first=True)
    assert out5.shape == ref5.shape
    assert jnp.allclose(out5, ref5, atol=1e-5), "case5 output mismatch"
    assert jnp.array_equal(olens5, rlens5), "case5 xlens mismatch"

    # Case 6: factor == 1 identity path.
    same, same_lens = mean_pool_subsampler(xs, xlens, 1)
    assert same is xs and same_lens is xlens

    print("KERNEL_OK")
</pallas_src>

<mosaic_0001>
module attributes {stable_mosaic.version = 11 : i64} {
  func.func @_mean_pool_even_kernel(%arg0: i32, %arg1: memref<8x256xf32, #tpu.memory_space<vmem>>, %arg2: memref<8x128xf32, #tpu.memory_space<vmem>>) attributes {dimension_semantics = [#tpu.dimension_semantics<parallel>], iteration_bounds = array<i64: 6>, scalar_prefetch = 0 : i64, scratch_operands = 0 : i64, tpu.core_type = #tpu.core_type<tc>, window_params = [{transform_indices = @transform_0, window_bounds = array<i64: 8, 256>}, {transform_indices = @transform_1, window_bounds = array<i64: 8, 128>}]} {
    %c0 = arith.constant 0 : index
    %c0_0 = arith.constant 0 : index
    %0 = vector.load %arg1[%c0, %c0_0] : memref<8x256xf32, #tpu.memory_space<vmem>>, vector<8x128xf32>
    %c0_1 = arith.constant 0 : index
    %c128 = arith.constant 128 : index
    %1 = vector.load %arg1[%c0_1, %c128] : memref<8x256xf32, #tpu.memory_space<vmem>>, vector<8x128xf32>
    %2 = arith.addf %0, %1 : vector<8x128xf32>
    %cst = arith.constant 5.000000e-01 : f32
    %3 = vector.broadcast %cst : f32 to vector<8x128xf32>
    %4 = arith.mulf %2, %3 : vector<8x128xf32>
    %c0_2 = arith.constant 0 : index
    %c0_3 = arith.constant 0 : index
    %5 = vector.load %arg2[%c0_2, %c0_3] : memref<8x128xf32, #tpu.memory_space<vmem>>, vector<8x128xf32>
    tpu.vector_store %arg2[%c0_2, %c0_3], %4 {strides = array<i32>} : memref<8x128xf32, #tpu.memory_space<vmem>>, vector<8x128xf32>,
    return
  }
  func.func @transform_0(%arg0: i32) -> (i32, i32) {
    %c0_i32 = arith.constant 0 : i32
    %c0_i32_0 = arith.constant 0 : i32
    return %arg0, %c0_i32 : i32, i32
  }
  func.func @transform_1(%arg0: i32) -> (i32, i32) {
    %c0_i32 = arith.constant 0 : i32
    %c0_i32_0 = arith.constant 0 : i32
    return %arg0, %c0_i32 : i32, i32
  }
}

</mosaic_0001>

<llo_original>
// kernel: tpu_custom_call.1
$region0: #{tpu_custom_call.1}
  #allocation0 [shape = 'u32[]', space=smem, size = 0x4, offset = 0x4, fixed_abs, tag = 'smem constant byte address 0x4 - core index']
  #allocation1 [shape = 'u32[144,128]{1,0:T(1,128)}', space=vmem, size = 0x12000, scoped, tag = 'internal scratch']
  %s0 = inlined_call_operand.hbm [shape: f32[48,256], index: 0, kind: input, shape index: {}]
  %s1 = inlined_call_operand.hbm [shape: f32[48,128], index: 1, kind: output, shape index: {}]
  %s2 = sld [smem:[#allocation0]]
  $region41: #{tpu_custom_call.1} parent=0
    _
  %s4 = ssub.s32 1, %s2
  %s5 = scalar_select 0, %s4, %s2
  $region1: #{tpu_custom_call.1} parent=0
    #allocation2 [shape = 'u8[16384]{0}', space=vmem, size = 0x4000, scoped, tag = 'input window, operand 0']
    #allocation3 [shape = 's32[2]{0}', space=sflag, size = 0x8, scoped, tag = 'scoped memory for tpu_custom_call.1']
    #allocation4 [shape = 's32[2]{0}', space=sflag, size = 0x8, scoped, tag = 'scoped memory for tpu_custom_call.1']
    #allocation5 [shape = 'u8[8192]{0}', space=vmem, size = 0x2000, scoped, tag = 'output window, operand 0']
    %6 = vsyncpa [#allocation3], 0
    %s7 = scalar_lea.sflag [#allocation3], 1
    %8 = vsyncpa %s7, 0
    %9 = vsyncpa [#allocation4], 0
    %s10 = scalar_lea.sflag [#allocation4], 1
    %11 = vsyncpa %s10, 0
    loop: start=0, step=1, limit=8
    $region2: #{tpu_custom_call.1} parent=1 // loop_pre_header
      _
    $region3: #{tpu_custom_call.1} parent=1 // loop_header
      %s13 = sphi 0, %s17
      %p14 = scmp.ge.s32.totalorder %s13, 8
      %s23 = sphi 0, %s25
      %s26 = sphi 0, %s23
      %s27 = sphi 0, %s26
      %s43 = sphi 0, %s27
      %s49 = sphi 0, %s51
      %s52 = sphi 0, %s49
      %s53 = sphi 0, %s52
      %s69 = sphi 0, %s53
    $region4: #{tpu_custom_call.1} parent=1 // loop_header_branch
      %16 = sbr.rel (%p14) target = $region8
    $region5: #{tpu_custom_call.1} parent=1 // loop_body
      %s18 = ssub.s32 %s13, 1
      %s19 = ssub.s32 %s13, 2
      %s20 = sadd.s32 %s13, 1
      %s21 = ssub.s32 %s13, %s20
      %p22 = scmp.eq.s32.totalorder %s21, 0
      %s24 = sadd.s32 %s23, 1
      %s25 = scalar_select %p22, %s23, %s24
      %p28 = pneg %p22
      %p29 = scmp.eq.s32.totalorder %s13, 5
      %p30 = por %p28, %p29
      %p31 = scmp.ne.s32.totalorder %s23, %s26
      %p32 = scmp.eq.s32.totalorder %s13, 0
      %p33 = por %p31, %p32
      %p34 = scmp.ne.s32.totalorder %s23, %s26
      %p35 = scmp.eq.s32.totalorder %s18, 5
      %p36 = por %p34, %p35
      %p37 = scmp.ne.s32.totalorder %s26, %s27
      %p38 = scmp.eq.s32.totalorder %s18, 0
      %p39 = por %p37, %p38
      %p40 = scmp.ne.s32.totalorder %s26, %s27
      %p41 = scmp.eq.s32.totalorder %s19, 5
      %p42 = por %p40, %p41
      %p44 = scmp.ne.s32.totalorder %s27, %s43
      %p45 = scmp.eq.s32.totalorder %s19, 0
      %p46 = por %p44, %p45
      %s47 = ssub.s32 %s13, %s20
      %p48 = scmp.eq.s32.totalorder %s47, 0
      %s50 = sadd.s32 %s49, 1
      %s51 = scalar_select %p48, %s49, %s50
      %p54 = pneg %p48
      %p55 = scmp.eq.s32.totalorder %s13, 5
      %p56 = por %p54, %p55
      %p57 = scmp.ne.s32.totalorder %s49, %s52
      %p58 = scmp.eq.s32.totalorder %s13, 0
      %p59 = por %p57, %p58
      %p60 = scmp.ne.s32.totalorder %s49, %s52
      %p61 = scmp.eq.s32.totalorder %s18, 5
      %p62 = por %p60, %p61
      %p63 = scmp.ne.s32.totalorder %s52, %s53
      %p64 = scmp.eq.s32.totalorder %s18, 0
      %p65 = por %p63, %p64
      %p66 = scmp.ne.s32.totalorder %s52, %s53
      %p67 = scmp.eq.s32.totalorder %s19, 5
      %p68 = por %p66, %p67
      %p70 = scmp.ne.s32.totalorder %s53, %s69
      %p71 = scmp.eq.s32.totalorder %s19, 0
      %p72 = por %p70, %p71
      %p73 = scmp.le.s32.totalorder 1, %s13
      %p74 = scmp.lt.s32.totalorder %s13, 7
      %p75 = pnand %p73, %p74
      %p76 = pneg %p75
      // Predicated region
      $region9: #{tpu_custom_call.1} parent=5 // pred_check
        _
      $region10: #{tpu_custom_call.1} parent=5 // pred_check_branch
        %78 = sbr.rel (%p75) target = $region12
      $region11: #{tpu_custom_call.1} parent=5 // pred_region
        %s79 = ssub.s32 %s13, 1
      $region12: #{tpu_custom_call.1} parent=5 // pred_fallthru
        _
      %p80 = scmp.lt.s32.totalorder %s13, 6
      // Predicated region
      $region13: #{tpu_custom_call.1} parent=5 // pred_check
        %p81 = pneg %p80
      $region14: #{tpu_custom_call.1} parent=5 // pred_check_branch
        %83 = sbr.rel (%p81) target = $region16
      $region15: #{tpu_custom_call.1} parent=5 // pred_region
        // Predicated region
        $region17: #{tpu_custom_call.1} parent=15 // pred_check
          %p84 = pneg %p33
        $region18: #{tpu_custom_call.1} parent=15 // pred_check_branch
          %86 = sbr.rel (%p84) target = $region20
        $region19: #{tpu_custom_call.1} parent=15 // pred_region
          %s87 = sand.u32 %s23, 1
          %s88 = scalar_lea.sflag [#allocation3], %s87
          %s89 = sand.u32 %s23, 1
          %s90 = smul.addr %s89, 16
          %s91 = scalar_lea.vmem [#allocation2], %s90
          %s93 = ssub.s32 256, 256
          %94 = vsyncadd %s88, %s93
          %s95 = smul.addr %s13, 2
          %s96 = smul.addr %s95, 128
          %s97 = scalar_lea.hbm %s0, %s96
          %s99 = sshll.u32 %s91, 4
          %s100 = int_to_ptr.vmem [resolvable:$true] %s99
          %102 = dma.hbm_to_vmem [thread:$0]  %s97, 256, %s100, %s88
        $region20: #{tpu_custom_call.1} parent=15 // pred_fallthru
          _
      $region16: #{tpu_custom_call.1} parent=5 // pred_fallthru
        _
      %p103 = scmp.le.s32.totalorder 1, %s13
      %p104 = scmp.lt.s32.totalorder %s13, 7
      %p105 = pnand %p103, %p104
      %p106 = pneg %p105
      // Predicated region
      $region21: #{tpu_custom_call.1} parent=5 // pred_check
        _
      $region22: #{tpu_custom_call.1} parent=5 // pred_check_branch
        %108 = sbr.rel (%p105) target = $region24
      $region23: #{tpu_custom_call.1} parent=5 // pred_region
        %s109 = ssub.s32 %s13, 1
        %s110 = sand.u32 %s26, 1
        %s111 = scalar_lea.sflag [#allocation3], %s110
        %s112 = sand.u32 %s26, 1
        %s113 = smul.addr %s112, 16
        %s114 = scalar_lea.vmem [#allocation2], %s113
        // Predicated region
        $region25: #{tpu_custom_call.1} parent=23 // pred_check
          %p115 = pneg %p39
        $region26: #{tpu_custom_call.1} parent=23 // pred_check_branch
          %117 = sbr.rel (%p115) target = $region28
        $region27: #{tpu_custom_call.1} parent=23 // pred_region
          %118 = dma.done %s111, 256
        $region28: #{tpu_custom_call.1} parent=23 // pred_fallthru
          _
        %s119 = sand.u32 %s26, 1
        %s120 = scalar_lea.sflag [#allocation3], %s119
        %s121 = sand.u32 %s26, 1
        %s122 = smul.addr %s121, 16
        %s123 = scalar_lea.vmem [#allocation2], %s122
        %p124 = pneg %p39
        %p125 = pneg %p36
        %p126 = pneg %p65
        %p127 = pneg %p62
        %s128 = sand.u32 %s52, 1
        %s129 = scalar_lea.sflag [#allocation4], %s128
        %s130 = sand.u32 %s52, 1
        %s131 = smul.addr %s130, 8
        %s132 = scalar_lea.vmem [#allocation5], %s131
        %v133 = vld [vmem:[%s114] sm:$0xff]
        %v134 = vld [vmem:[%s114 + $0x8] sm:$0xff]
        %v135 = vadd.f32 %v133, %v134
        %v136 = vmul.f32 %v135, 0.5
        %137 = vst [vmem:[%s132] sm:$0xff] %v136
        %s138 = sand.u32 %s52, 1
        %s139 = scalar_lea.sflag [#allocation4], %s138
        %s140 = sand.u32 %s52, 1
        %s141 = smul.addr %s140, 8
        %s142 = scalar_lea.vmem [#allocation5], %s141
        // Predicated region
        $region29: #{tpu_custom_call.1} parent=23 // pred_check
          %p143 = pneg %p62
        $region30: #{tpu_custom_call.1} parent=23 // pred_check_branch
          %145 = sbr.rel (%p143) target = $region32
        $region31: #{tpu_custom_call.1} parent=23 // pred_region
          %s147 = ssub.s32 128, 128
          %148 = vsyncadd %s139, %s147
          %s149 = smul.addr %s18, 128
          %s150 = scalar_lea.hbm %s1, %s149
          %s152 = sshll.u32 %s142, 4
          %s153 = int_to_ptr.vmem [resolvable:$true] %s152
          %155 = dma.vmem_to_hbm [thread:$0]  %s153, 128, %s150, %s139
        $region32: #{tpu_custom_call.1} parent=23 // pred_fallthru
          _
      $region24: #{tpu_custom_call.1} parent=5 // pred_fallthru
        _
      %p156 = scmp.le.s32.totalorder 2, %s13
      // Predicated region
      $region33: #{tpu_custom_call.1} parent=5 // pred_check
        %p157 = pneg %p156
      $region34: #{tpu_custom_call.1} parent=5 // pred_check_branch
        %159 = sbr.rel (%p157) target = $region36
      $region35: #{tpu_custom_call.1} parent=5 // pred_region
        %s160 = ssub.s32 %s13, 2
        // Predicated region
        $region37: #{tpu_custom_call.1} parent=35 // pred_check
          %p161 = pneg %p68
        $region38: #{tpu_custom_call.1} parent=35 // pred_check_branch
          %163 = sbr.rel (%p161) target = $region40
        $region39: #{tpu_custom_call.1} parent=35 // pred_region
          %s164 = sand.u32 %s53, 1
          %s165 = scalar_lea.sflag [#allocation4], %s164
          %s166 = sand.u32 %s53, 1
          %s167 = smul.addr %s166, 8
          %s168 = scalar_lea.vmem [#allocation5], %s167
          %169 = dma.done %s165, 128
        $region40: #{tpu_custom_call.1} parent=35 // pred_fallthru
          _
      $region36: #{tpu_custom_call.1} parent=5 // pred_fallthru
        _
    $region6: #{tpu_custom_call.1} parent=1 // loop_footer
      %s17 = sadd.s32 1, %s13
    $region7: #{tpu_custom_call.1} parent=1 // loop_footer_branch
      %12 = sbr.rel target = $region3
    $region8: #{tpu_custom_call.1} parent=1 // loop_exit
      _
    %170 = vsyncpa [#allocation3], 1
    %s171 = scalar_lea.sflag [#allocation3], 1
    %172 = vsyncpa %s171, 1
    %173 = vsyncpa [#allocation4], 1
    %s174 = scalar_lea.sflag [#allocation4], 1
    %175 = vsyncpa %s174, 1

</llo_original>
